<compile_context>
chip_gen: v5e
topology: v5e:2x2
jax: 0.10.0
libtpu: 0.0.40
codegen_flags: <defaults>
</compile_context>

<pallas_src>
import functools

import jax
import jax.numpy as jnp
from jax.experimental import pallas as pl
from jax.experimental.pallas import tpu as pltpu

_LANE = 128          # lane width: class axis is padded to this *inside the kernel only*
_NEG_BIG = -1.0e30   # bias for padded (fake) classes -> exp underflows to exactly 0 (f32)


def _round_up(x, m):
    return (x + m - 1) // m * m


def _cdiv(a, b):
    return (a + b - 1) // b


def pad_class_params(w2, b2):
    """One-time (model init) padding of l2 params to 128 lanes for in-kernel math.

    Padded columns get zero weights and a -1e30 bias so they contribute exactly 0 to
    the softmax; they are never written back to HBM.
    """
    y_dim = w2.shape[1]
    out_pad = _round_up(max(y_dim, _LANE), _LANE)
    w2p = jnp.zeros((w2.shape[0], out_pad), w2.dtype).at[:, :y_dim].set(w2)
    b2p = jnp.full((1, out_pad), _NEG_BIG, b2.dtype).at[:, :y_dim].set(b2)
    return w2p, b2p


def _leaf_builder_kernel(x_ref, w1_ref, b1_ref, w2_ref, b2_ref, o_ref):
    # x_ref:  (bn, 2*r_dim)   w1_ref: (2*r_dim, 20)   b1_ref: (1, 20)
    # w2_ref: (20, 128)       b2_ref: (1, 128)        o_ref:  (bn, y_dim)
    x = x_ref[...]

    # Linear 1 + ReLU (MXU matmul, f32 accumulation)
    h = jnp.dot(x, w1_ref[...], preferred_element_type=jnp.float32) + b1_ref[...]
    h = jnp.maximum(h, 0.0)

    # Linear 2 on the 128-lane-padded class axis (fake classes carry -1e30 bias)
    logits = jnp.dot(h, w2_ref[...], preferred_element_type=jnp.float32) + b2_ref[...]

    # Numerically-stable softmax along the class (last) axis == torch softmax(dim=1).
    # Exact division: rows sum to 1 to f32 rounding (approx reciprocal removed).
    m = jnp.max(logits, axis=-1, keepdims=True)
    e = jnp.exp(logits - m)
    denom = jnp.sum(e, axis=-1, keepdims=True)
    probs = e / denom

    # Store only the real classes -> narrow HBM writeback, no external slice pass.
    y_dim = o_ref.shape[-1]
    o_ref[...] = probs[:, :y_dim].astype(o_ref.dtype)


@functools.partial(jax.jit, static_argnames=("y_dim", "block_n", "out_dtype"))
def _leaf_builder_call(x, w1, b1, w2p, b2p, *, y_dim, block_n, out_dtype):
    n, in_dim = x.shape
    hidden = w1.shape[1]
    out_pad = w2p.shape[1]
    grid = (_cdiv(n, block_n),)

    out_itemsize = jnp.dtype(out_dtype).itemsize
    flops = 2 * n * (in_dim * hidden + hidden * out_pad)
    transcendentals = n * out_pad                         # exp
    bytes_accessed = (
        4 * (n * in_dim + in_dim * hidden + hidden + hidden * out_pad + out_pad)
        + out_itemsize * n * y_dim
    )

    return pl.pallas_call(
        _leaf_builder_kernel,
        out_shape=jax.ShapeDtypeStruct((n, y_dim), out_dtype),
        grid_spec=pltpu.PrefetchScalarGridSpec(
            num_scalar_prefetch=0,
            grid=grid,
            in_specs=[
                pl.BlockSpec((block_n, in_dim), lambda i: (i, 0)),
                pl.BlockSpec((in_dim, hidden), lambda i: (0, 0)),
                pl.BlockSpec((1, hidden), lambda i: (0, 0)),
                pl.BlockSpec((hidden, out_pad), lambda i: (0, 0)),
                pl.BlockSpec((1, out_pad), lambda i: (0, 0)),
            ],
            out_specs=pl.BlockSpec((block_n, y_dim), lambda i: (i, 0)),
        ),
        compiler_params=pltpu.CompilerParams(
            dimension_semantics=("parallel",),
        ),
        cost_estimate=pl.CostEstimate(
            flops=flops,
            transcendentals=transcendentals,
            bytes_accessed=bytes_accessed,
        ),
    )(x, w1, b1, w2p, b2p)


def _choose_block_n(n, *, max_block=8192, split_threshold=2048):
    """Row-tile size: big tiles to amortize ~0.35us/step overhead, capped at 8192 rows
    (double-buffered in+out fits v5e's 16 MiB default scoped VMEM), and at least 2 grid
    steps once N is non-trivial so v7x's 2 TensorCores both get work."""
    num_steps = max(1, _cdiv(n, max_block))
    if n > split_threshold:
        num_steps = max(num_steps, 2)
    return _round_up(_cdiv(n, num_steps), 8)


def leaf_builder_get_node(representation, w1, b1, w2p, b2p, y_dim, *,
                          block_n=None, out_dtype=jnp.float32):
    """Pallas implementation of LeafBuilderClassification.get_node -> leaf preds.

    w1/b1 stored pre-transposed as [in_features, out_features] / [1, out];
    w2p/b2p are the 128-lane-padded l2 params from pad_class_params (built once).
    Works for arbitrary batch size N (Pallas masks the ragged boundary block).
    Set out_dtype=jnp.bfloat16 to halve HBM write traffic if downstream tolerates it.
    """
    n = representation.shape[0]
    if block_n is None:
        block_n = _choose_block_n(n)
    return _leaf_builder_call(representation, w1, b1, w2p, b2p,
                              y_dim=y_dim, block_n=block_n, out_dtype=out_dtype)


def leaf_predict(preds, n_samples):
    # Leaf.predict: preds.unsqueeze(1).repeat(1, n_samples, 1) — pure broadcast glue.
    return jnp.broadcast_to(preds[:, None, :],
                            (preds.shape[0], n_samples, preds.shape[1]))


def init_params(key, r_dim, y_dim, hidden=20):
    """Deterministic init mimicking nn.Linear's uniform(-1/sqrt(fan_in), 1/sqrt(fan_in))."""
    in_dim = 2 * r_dim
    k1, k2, k3, k4 = jax.random.split(key, 4)
    bound1 = 1.0 / jnp.sqrt(in_dim)
    bound2 = 1.0 / jnp.sqrt(hidden)
    # stored as [in, out] (transpose of torch's [out, in]) so kernel does x @ W
    w1 = jax.random.uniform(k1, (in_dim, hidden), jnp.float32, -bound1, bound1)
    b1 = jax.random.uniform(k2, (1, hidden), jnp.float32, -bound1, bound1)
    w2 = jax.random.uniform(k3, (hidden, y_dim), jnp.float32, -bound2, bound2)
    b2 = jax.random.uniform(k4, (1, y_dim), jnp.float32, -bound2, bound2)
    return w1, b1, w2, b2


def reference_get_node(representation, w1, b1, w2, b2):
    h = jnp.maximum(
        jnp.dot(representation, w1, precision=jax.lax.Precision.HIGHEST) + b1, 0.0)
    logits = jnp.dot(h, w2, precision=jax.lax.Precision.HIGHEST) + b2
    return jax.nn.softmax(logits, axis=-1)


if __name__ == "__main__":
    r_dim = 16     # representation half-dim -> linear input = 2*r_dim = 32
    y_dim = 10     # number of classes
    n = 16         # number of "representations" (rows)

    key = jax.random.PRNGKey(0)
    k_rep, k_par = jax.random.split(key)
    representation = jax.random.normal(k_rep, (n, 2 * r_dim), jnp.float32)
    w1, b1, w2, b2 = init_params(k_par, r_dim, y_dim)
    w2p, b2p = pad_class_params(w2, b2)   # one-time at model init (hoisted off hot path)

    preds = leaf_builder_get_node(representation, w1, b1, w2p, b2p, y_dim)
    preds = jax.block_until_ready(preds)
    assert preds.shape == (n, y_dim)

    ref = reference_get_node(representation, w1, b1, w2, b2)
    assert jnp.allclose(preds, ref, atol=1e-3, rtol=1e-3), "mismatch vs reference"
    assert jnp.allclose(jnp.sum(preds, axis=-1), 1.0, atol=1e-4), "softmax rows must sum to 1"

    # Exercise the ragged-boundary path (n not a multiple of 8 / of the tile).
    n2 = 13
    rep2 = jax.random.normal(jax.random.PRNGKey(1), (n2, 2 * r_dim), jnp.float32)
    preds2 = jax.block_until_ready(
        leaf_builder_get_node(rep2, w1, b1, w2p, b2p, y_dim))
    ref2 = reference_get_node(rep2, w1, b1, w2, b2)
    assert preds2.shape == (n2, y_dim)
    assert jnp.allclose(preds2, ref2, atol=1e-3, rtol=1e-3), "ragged-N mismatch vs reference"

    # Leaf.predict (glue broadcast, not a kernel)
    leaf_out = jax.block_until_ready(leaf_predict(preds, n_samples=4))
    assert leaf_out.shape == (n, 4, y_dim)

    print("KERNEL_OK")
</pallas_src>

<mosaic_0001>
module attributes {stable_mosaic.version = 11 : i64} {
  func.func @_leaf_builder_kernel(%arg0: i32, %arg1: memref<16x32xf32, #tpu.memory_space<vmem>>, %arg2: memref<32x20xf32, #tpu.memory_space<vmem>>, %arg3: memref<1x20xf32, #tpu.memory_space<vmem>>, %arg4: memref<20x128xf32, #tpu.memory_space<vmem>>, %arg5: memref<1x128xf32, #tpu.memory_space<vmem>>, %arg6: memref<16x10xf32, #tpu.memory_space<vmem>>) attributes {dimension_semantics = [#tpu.dimension_semantics<parallel>], iteration_bounds = array<i64: 1>, scalar_prefetch = 0 : i64, scratch_operands = 0 : i64, tpu.core_type = #tpu.core_type<tc>, window_params = [{transform_indices = @transform_0, window_bounds = array<i64: 16, 32>}, {pipeline_mode = #tpu.pipeline_mode<synchronous>, transform_indices = @transform_1, window_bounds = array<i64: 32, 20>}, {pipeline_mode = #tpu.pipeline_mode<synchronous>, transform_indices = @transform_2, window_bounds = array<i64: 1, 20>}, {pipeline_mode = #tpu.pipeline_mode<synchronous>, transform_indices = @transform_3, window_bounds = array<i64: 20, 128>}, {pipeline_mode = #tpu.pipeline_mode<synchronous>, transform_indices = @transform_4, window_bounds = array<i64: 1, 128>}, {transform_indices = @transform_5, window_bounds = array<i64: 16, 10>}]} {
    %c0 = arith.constant 0 : index
    %c0_0 = arith.constant 0 : index
    %0 = vector.load %arg1[%c0, %c0_0] : memref<16x32xf32, #tpu.memory_space<vmem>>, vector<16x32xf32>
    %c0_1 = arith.constant 0 : index
    %c0_2 = arith.constant 0 : index
    %1 = vector.load %arg2[%c0_1, %c0_2] : memref<32x20xf32, #tpu.memory_space<vmem>>, vector<32x20xf32>
    %cst = arith.constant dense<0.000000e+00> : vector<16x20xf32>
    %2 = tpu.matmul %0, %1, %cst {dimension_numbers = #tpu.dot_dimension_numbers<[1], [0], [0], [1], [0, 0, 1, 1], [], []>} : vector<16x32xf32>, vector<32x20xf32>, vector<16x20xf32> -> vector<16x20xf32>
    %c0_3 = arith.constant 0 : index
    %c0_4 = arith.constant 0 : index
    %3 = vector.load %arg3[%c0_3, %c0_4] : memref<1x20xf32, #tpu.memory_space<vmem>>, vector<1x20xf32>
    %4 = vector.broadcast %3 : vector<1x20xf32> to vector<16x20xf32>
    %5 = arith.addf %2, %4 : vector<16x20xf32>
    %cst_5 = arith.constant 0.000000e+00 : f32
    %6 = vector.broadcast %cst_5 : f32 to vector<16x20xf32>
    %7 = arith.maximumf %5, %6 : vector<16x20xf32>
    %c0_6 = arith.constant 0 : index
    %c0_7 = arith.constant 0 : index
    %8 = vector.load %arg4[%c0_6, %c0_7] : memref<20x128xf32, #tpu.memory_space<vmem>>, vector<20x128xf32>
    %cst_8 = arith.constant dense<0.000000e+00> : vector<16x128xf32>
    %9 = tpu.matmul %7, %8, %cst_8 {dimension_numbers = #tpu.dot_dimension_numbers<[1], [0], [0], [1], [0, 0, 1, 1], [], []>} : vector<16x20xf32>, vector<20x128xf32>, vector<16x128xf32> -> vector<16x128xf32>
    %c0_9 = arith.constant 0 : index
    %c0_10 = arith.constant 0 : index
    %10 = vector.load %arg5[%c0_9, %c0_10] : memref<1x128xf32, #tpu.memory_space<vmem>>, vector<1x128xf32>
    %11 = vector.broadcast %10 : vector<1x128xf32> to vector<16x128xf32>
    %12 = arith.addf %9, %11 : vector<16x128xf32>
    %cst_11 = arith.constant dense<0xFF800000> : vector<16xf32>
    %13 = vector.multi_reduction <maximumf>, %12, %cst_11 [1] : vector<16x128xf32> to vector<16xf32>
    %14 = vector.shape_cast %13 : vector<16xf32> to vector<16x1xf32>
    %15 = vector.broadcast %14 : vector<16x1xf32> to vector<16x128xf32>
    %16 = arith.subf %12, %15 : vector<16x128xf32>
    %17 = math.exp %16 : vector<16x128xf32>
    %cst_12 = arith.constant dense<0.000000e+00> : vector<16xf32>
    %18 = vector.multi_reduction <add>, %17, %cst_12 [1] : vector<16x128xf32> to vector<16xf32>
    %19 = vector.shape_cast %18 : vector<16xf32> to vector<16x1xf32>
    %20 = vector.broadcast %19 : vector<16x1xf32> to vector<16x128xf32>
    %21 = arith.divf %17, %20 : vector<16x128xf32>
    %22 = vector.extract_strided_slice %21 {offsets = [0, 0], sizes = [16, 10], strides = [1, 1]} : vector<16x128xf32> to vector<16x10xf32>
    %c0_13 = arith.constant 0 : index
    %c0_14 = arith.constant 0 : index
    %23 = vector.load %arg6[%c0_13, %c0_14] : memref<16x10xf32, #tpu.memory_space<vmem>>, vector<16x10xf32>
    tpu.vector_store %arg6[%c0_13, %c0_14], %22 {strides = array<i32>} : memref<16x10xf32, #tpu.memory_space<vmem>>, vector<16x10xf32>,
    return
  }
  func.func @transform_0(%arg0: i32) -> (i32, i32) {
    %c0_i32 = arith.constant 0 : i32
    %c0_i32_0 = arith.constant 0 : i32
    return %arg0, %c0_i32 : i32, i32
  }
  func.func @transform_1(%arg0: i32) -> (i32, i32) {
    %c0_i32 = arith.constant 0 : i32
    %c0_i32_0 = arith.constant 0 : i32
    %c0_i32_1 = arith.constant 0 : i32
    return %c0_i32, %c0_i32_0 : i32, i32
  }
  func.func @transform_2(%arg0: i32) -> (i32, i32) {
    %c0_i32 = arith.constant 0 : i32
    %c0_i32_0 = arith.constant 0 : i32
    %c0_i32_1 = arith.constant 0 : i32
    return %c0_i32, %c0_i32_0 : i32, i32
  }
  func.func @transform_3(%arg0: i32) -> (i32, i32) {
    %c0_i32 = arith.constant 0 : i32
    %c0_i32_0 = arith.constant 0 : i32
    %c0_i32_1 = arith.constant 0 : i32
    return %c0_i32, %c0_i32_0 : i32, i32
  }
  func.func @transform_4(%arg0: i32) -> (i32, i32) {
    %c0_i32 = arith.constant 0 : i32
    %c0_i32_0 = arith.constant 0 : i32
    %c0_i32_1 = arith.constant 0 : i32
    return %c0_i32, %c0_i32_0 : i32, i32
  }
  func.func @transform_5(%arg0: i32) -> (i32, i32) {
    %c0_i32 = arith.constant 0 : i32
    %c0_i32_0 = arith.constant 0 : i32
    return %arg0, %c0_i32 : i32, i32
  }
}

</mosaic_0001>

<llo_original>
// kernel: _leaf_builder_call.1
$region0: #{_leaf_builder_call.1}
  #allocation0 [shape = 'u32[]', space=smem, size = 0x4, offset = 0x4, fixed_abs, tag = 'smem constant byte address 0x4 - core index']
  #allocation1 [shape = 'u32[72,128]{1,0:T(1,128)}', space=vmem, size = 0x9000, scoped, tag = 'internal scratch']
  %s0 = inlined_call_operand.vmem [shape: f32[16,32], index: 0, kind: input, shape index: {}]
  %s1 = inlined_call_operand.vmem [shape: f32[32,20], index: 1, kind: input, shape index: {}]
  %s2 = inlined_call_operand.vmem [shape: f32[1,20], index: 2, kind: input, shape index: {}]
  %s3 = inlined_call_operand.vmem [shape: f32[20,128], index: 3, kind: input, shape index: {}]
  %s4 = inlined_call_operand.vmem [shape: f32[1,128], index: 4, kind: input, shape index: {}]
  %s5 = inlined_call_operand.hbm [shape: f32[16,10], index: 5, kind: output, shape index: {}]
  %s6 = sld [smem:[#allocation0]]
  $region30: #{_leaf_builder_call.1} parent=0
    _
  %s8 = ssub.s32 1, %s6
  %s9 = scalar_select 0, %s8, %s6
  $region1: #{_leaf_builder_call.1} parent=0
    #allocation2 [shape = 'u8[8192]{0}', space=vmem, size = 0x2000, scoped, tag = 'output window, operand 0, single buffered']
    #allocation3 [shape = 's32[1]{0}', space=sflag, size = 0x4, scoped, tag = 'scoped memory for _leaf_builder_call.1']
    %10 = vsyncpa [#allocation3], 0
    // Predicated region
    $region2: #{_leaf_builder_call.1} parent=1 // pred_check
      _
    $region3: #{_leaf_builder_call.1} parent=1 // pred_check_branch
      %12 = sbr.rel (0) target = $region5
    $region4: #{_leaf_builder_call.1} parent=1 // pred_region
      _
    $region5: #{_leaf_builder_call.1} parent=1 // pred_fallthru
      _
    // Predicated region
    $region6: #{_leaf_builder_call.1} parent=1 // pred_check
      _
    $region7: #{_leaf_builder_call.1} parent=1 // pred_check_branch
      %14 = sbr.rel (0) target = $region9
    $region8: #{_leaf_builder_call.1} parent=1 // pred_region
      _
    $region9: #{_leaf_builder_call.1} parent=1 // pred_fallthru
      _
    // Predicated region
    $region10: #{_leaf_builder_call.1} parent=1 // pred_check
      _
    $region11: #{_leaf_builder_call.1} parent=1 // pred_check_branch
      %16 = sbr.rel (0) target = $region13
    $region12: #{_leaf_builder_call.1} parent=1 // pred_region
      _
    $region13: #{_leaf_builder_call.1} parent=1 // pred_fallthru
      _
    // Predicated region
    $region14: #{_leaf_builder_call.1} parent=1 // pred_check
      _
    $region15: #{_leaf_builder_call.1} parent=1 // pred_check_branch
      %18 = sbr.rel (0) target = $region17
    $region16: #{_leaf_builder_call.1} parent=1 // pred_region
      _
    $region17: #{_leaf_builder_call.1} parent=1 // pred_fallthru
      _
    // Predicated region
    $region18: #{_leaf_builder_call.1} parent=1 // pred_check
      _
    $region19: #{_leaf_builder_call.1} parent=1 // pred_check_branch
      %20 = sbr.rel (0) target = $region21
    $region20: #{_leaf_builder_call.1} parent=1 // pred_region
      _
    $region21: #{_leaf_builder_call.1} parent=1 // pred_fallthru
      _
    %v21 = vld [vmem:[%s0] sm:$0xff]
    %v22 = vld [vmem:[%s0 + $0x8] sm:$0xff]
    %v23 = vld [vmem:[%s1] sm:$0xff]
    %v24 = vld [vmem:[%s1 + $0x8] sm:$0xff]
    %v25 = vld [vmem:[%s1 + $0x10] sm:$0xff]
    %v26 = vld [vmem:[%s1 + $0x18] sm:$0xff]
    %v27 = vld [vmem:[%s2] sm:$0x1]
    %v29 = vperm.slane %v27, 0
    %vm31 = vcmask 261120
    %v33 = vsel %vm31, %v21, 0
    %v36 = vsel %vm31, %v22, 0
    %38 = vmatpush.msra.mxu0 0.0
    %39 = vmatpush.msra.mxu0 0.0
    %40 = vmatpush.msra.mxu0 0.0
    %41 = vmatpush.msra.mxu0 0.0
    %42 = vmatpush.msra.mxu0 0.0
    %43 = vmatpush.msra.mxu0 0.0
    %44 = vmatpush.msra.mxu0 0.0
    %45 = vmatpush.msra.mxu0 0.0
    %46 = vmatpush.msra.mxu0 0.0
    %47 = vmatpush.msra.mxu0 0.0
    %48 = vmatpush.msra.mxu0 0.0
    %49 = vmatpush.msra.mxu0 0.0
    %50 = vmatpush.msra.mxu0 %v26
    %51 = vmatpush.msra.mxu0 %v25
    %52 = vmatpush.msra.mxu0 %v24
    %53 = vmatpush.msra.mxu0 %v23
    %54 = vmatmul.f32.gmra.mxu0 %v33
    %v55 = vpop.f32.mrf.mxu0
    %v56 = vadd.f32 %v29, %v55
    %57 = vmatmul.f32.gmra.mxu0 %v36
    %v58 = vpop.f32.mrf.mxu0
    %v59 = vadd.f32 %v29, %v58
    %60 = vdwg.mxu0
    %v61 = vmax.f32 %v56, 0.0
    %v62 = vmax.f32 %v59, 0.0
    %v63 = vld [vmem:[%s3] sm:$0xff]
    %v64 = vld [vmem:[%s3 + $0x8] sm:$0xff]
    %v65 = vld [vmem:[%s3 + $0x10] sm:$0xf]
    %v66 = vld [vmem:[%s4] sm:$0x1]
    %v68 = vperm.slane %v66, 0
    %vm70 = vcmask 162816
    %v72 = vsel %vm70, %v61, 0
    %v75 = vsel %vm70, %v62, 0
    %vm77 = vcmask 1043456
    %v79 = vsel %vm77, %v65, 0
    %81 = vmatpush.msra.mxu0 0.0
    %82 = vmatpush.msra.mxu0 0.0
    %83 = vmatpush.msra.mxu0 0.0
    %84 = vmatpush.msra.mxu0 0.0
    %85 = vmatpush.msra.mxu0 0.0
    %86 = vmatpush.msra.mxu0 0.0
    %87 = vmatpush.msra.mxu0 0.0
    %88 = vmatpush.msra.mxu0 0.0
    %89 = vmatpush.msra.mxu0 0.0
    %90 = vmatpush.msra.mxu0 0.0
    %91 = vmatpush.msra.mxu0 0.0
    %92 = vmatpush.msra.mxu0 0.0
    %93 = vmatpush.msra.mxu0 0.0
    %94 = vmatpush.msra.mxu0 %v79
    %95 = vmatpush.msra.mxu0 %v64
    %96 = vmatpush.msra.mxu0 %v63
    %97 = vmatmul.f32.gmra.mxu0 %v72
    %v98 = vpop.f32.mrf.mxu0
    %v99 = vadd.f32 %v68, %v98
    %100 = vmatmul.f32.gmra.mxu0 %v75
    %v101 = vpop.f32.mrf.mxu0
    %v102 = vadd.f32 %v68, %v101
    %103 = vdwg.mxu0
    %104 = vmax.xlane.f32.xlu0 %v99
    %v105 = vpop.xlane.xlu0 %104
    %106 = vmax.xlane.f32.xlu0 %v102
    %v107 = vpop.xlane.xlu0 %106
    %v108 = vsub.f32 %v99, %v105
    %v109 = vsub.f32 %v102, %v107
    %v110 = vmul.f32 %v108, 1.442695
    %v111 = vpow.pop %v110
    %v112 = vmul.f32 %v109, 1.442695
    %v113 = vpow.pop %v112
    %114 = vadd.xlane.f32.xlu0 %v111
    %v115 = vpop.xlane.xlu0 %114
    %116 = vadd.xlane.f32.xlu0 %v113
    %v117 = vpop.xlane.xlu0 %116
    %v118 = vrcp.pop %v115
    %v119 = vmul.f32 %v115, %v118
    %v120 = vsub.f32 1.0, %v119
    %v121 = vmul.f32 %v118, %v120
    %v122 = vadd.f32 %v118, %v121
    %vm123 = vweird.f32 %v115
    %vm124 = vweird.f32 %v118
    %vm125 = vmor %vm123, %vm124
    %v126 = vsel %vm125, %v118, %v122
    %v127 = vand.u32 2147483647, %v115
    %vm128 = vcmp.eq.f32.partialorder %v127, 8.507059e+37
    %v129 = vand.u32 %v115, 2147483648
    %v130 = vor.u32 1.1754944e-38, %v129
    %v131 = vsel %vm128, %v130, %v126
    %v132 = vmul.f32 %v111, %v131
    %v133 = vrcp.pop %v117
    %v134 = vmul.f32 %v117, %v133
    %v135 = vsub.f32 1.0, %v134
    %v136 = vmul.f32 %v133, %v135
    %v137 = vadd.f32 %v133, %v136
    %vm138 = vweird.f32 %v117
    %vm139 = vweird.f32 %v133
    %vm140 = vmor %vm138, %vm139
    %v141 = vsel %vm140, %v133, %v137
    %v142 = vand.u32 2147483647, %v117
    %vm143 = vcmp.eq.f32.partialorder %v142, 8.507059e+37
    %v144 = vand.u32 %v117, 2147483648
    %v145 = vor.u32 1.1754944e-38, %v144
    %v146 = vsel %vm143, %v145, %v141
    %v147 = vmul.f32 %v113, %v146
    %vm148 = vcmask 80896
    %149 = vst.msk [vmem:[#allocation2] sm:$0xff] %vm148, %v132
    %150 = vst.msk [vmem:[#allocation2 + $0x8] sm:$0xff] %vm148, %v147
    // Predicated region
    $region22: #{_leaf_builder_call.1} parent=1 // pred_check
      _
    $region23: #{_leaf_builder_call.1} parent=1 // pred_check_branch
      %152 = sbr.rel (0) target = $region25
    $region24: #{_leaf_builder_call.1} parent=1 // pred_region
      %154 = vsyncadd [#allocation3], 0
      %s155 = sshll.u32 [#allocation2], 4
      %s156 = int_to_ptr.vmem [resolvable:$true] %s155
      %s157 = sshll.u32 %s5, 4
      %s158 = int_to_ptr.hbm [resolvable:$true] %s157
      %163 = dma.vmem_to_hbm [thread:$0]  %s156, 256, %s158, [#allocation3], 128, 128, 8
    $region25: #{_leaf_builder_call.1} parent=1 // pred_fallthru
      _
    // Predicated region
    $region26: #{_leaf_builder_call.1} parent=1 // pred_check
      _
    $region27: #{_leaf_builder_call.1} parent=1 // pred_check_branch
      %165 = sbr.rel (0) target = $region29
    $region28: #{_leaf_builder_call.1} parent=1 // pred_region
      %167 = dma.done [#allocation3], 256
    $region29: #{_leaf_builder_call.1} parent=1 // pred_fallthru
      _
    %168 = vsyncpa [#allocation3], 1

</llo_original>
